<compile_context>
chip_gen: v5e
topology: v5e:2x2
jax: 0.10.0
libtpu: 0.0.40
codegen_flags: <defaults>
</compile_context>

<pallas_src>
import jax
import jax.numpy as jnp
from jax.experimental import pallas as pl
from jax.experimental.pallas import tpu as pltpu


def _pq_kernel(p_ref, qt_ref, o_ref):
    # p tile: (tm, K), q^T block: (K, N)  ->  out tile: (tm, N), f32 accumulate.
    o_ref[...] = jnp.dot(
        p_ref[...], qt_ref[...], preferred_element_type=jnp.float32
    )


def pq_forward(p, q, *, tm=128):
    """Computes p @ q.T with a Pallas TPU matmul kernel.

    The factor dim (K) and the full q_dim (N) are kept resident per block; the
    grid only splits M so that chips with 2 TensorCores (v7x) get >=2 parallel
    steps for the shipped problem size.
    """
    M, K = p.shape
    N, Kq = q.shape
    assert K == Kq, "factor dims must match"

    # Fall back to a single full-M block if M doesn't tile evenly by tm.
    if M % tm != 0 or M < tm:
        tm = M

    # One-time (K, N) transpose outside the kernel — essentially free, keeps
    # the MXU fed from a native (K, N) rhs layout with no per-step relayout.
    q_t = q.T

    # TODO(synk): if scaled to production p_dim/q_dim, re-derive tiling against
    # the 64 MiB v7x VMEM (the full (K, N) rhs block no longer fits).
    return pl.pallas_call(
        _pq_kernel,
        out_shape=jax.ShapeDtypeStruct((M, N), jnp.float32),
        grid_spec=pl.GridSpec(
            grid=(M // tm,),
            in_specs=[
                pl.BlockSpec((tm, K), lambda i: (i, 0)),   # P tile (full K)
                pl.BlockSpec((K, N), lambda i: (0, 0)),    # whole Q^T, resident
            ],
            out_specs=pl.BlockSpec((tm, N), lambda i: (i, 0)),
        ),
        compiler_params=pltpu.CompilerParams(
            dimension_semantics=("parallel",),
        ),
    )(p, q_t)


if __name__ == "__main__":
    # Module init: p ~ randn(p_dim, num_factors), q ~ randn(q_dim, num_factors)
    p_dim, q_dim, num_factors = 256, 384, 128

    key = jax.random.PRNGKey(0)
    kp, kq = jax.random.split(key)
    p = jax.random.normal(kp, (p_dim, num_factors), dtype=jnp.float32)
    q = jax.random.normal(kq, (q_dim, num_factors), dtype=jnp.float32)

    out = jax.block_until_ready(pq_forward(p, q))

    # Sanity check against plain JAX reference of the PyTorch forward.
    ref = p @ q.T
    assert out.shape == (p_dim, q_dim)
    assert jnp.allclose(out, ref, atol=1e-4, rtol=1e-4)

    print("KERNEL_OK")
</pallas_src>

<mosaic_0001>
module attributes {stable_mosaic.version = 11 : i64} {
  func.func @_pq_kernel(%arg0: i32, %arg1: memref<128x128xf32, #tpu.memory_space<vmem>>, %arg2: memref<128x384xf32, #tpu.memory_space<vmem>>, %arg3: memref<128x384xf32, #tpu.memory_space<vmem>>) attributes {dimension_semantics = [#tpu.dimension_semantics<parallel>], iteration_bounds = array<i64: 2>, scalar_prefetch = 0 : i64, scratch_operands = 0 : i64, tpu.core_type = #tpu.core_type<tc>, window_params = [{transform_indices = @transform_0, window_bounds = array<i64: 128, 128>}, {pipeline_mode = #tpu.pipeline_mode<synchronous>, transform_indices = @transform_1, window_bounds = array<i64: 128, 384>}, {transform_indices = @transform_2, window_bounds = array<i64: 128, 384>}]} {
    %c0 = arith.constant 0 : index
    %c0_0 = arith.constant 0 : index
    %0 = vector.load %arg1[%c0, %c0_0] : memref<128x128xf32, #tpu.memory_space<vmem>>, vector<128x128xf32>
    %c0_1 = arith.constant 0 : index
    %c0_2 = arith.constant 0 : index
    %1 = vector.load %arg2[%c0_1, %c0_2] : memref<128x384xf32, #tpu.memory_space<vmem>>, vector<128x384xf32>
    %cst = arith.constant dense<0.000000e+00> : vector<128x384xf32>
    %2 = tpu.matmul %0, %1, %cst {dimension_numbers = #tpu.dot_dimension_numbers<[1], [0], [0], [1], [0, 0, 1, 1], [], []>} : vector<128x128xf32>, vector<128x384xf32>, vector<128x384xf32> -> vector<128x384xf32>
    %c0_3 = arith.constant 0 : index
    %c0_4 = arith.constant 0 : index
    %3 = vector.load %arg3[%c0_3, %c0_4] : memref<128x384xf32, #tpu.memory_space<vmem>>, vector<128x384xf32>
    tpu.vector_store %arg3[%c0_3, %c0_4], %2 {strides = array<i32>} : memref<128x384xf32, #tpu.memory_space<vmem>>, vector<128x384xf32>,
    return
  }
  func.func @transform_0(%arg0: i32) -> (i32, i32) {
    %c0_i32 = arith.constant 0 : i32
    %c0_i32_0 = arith.constant 0 : i32
    return %arg0, %c0_i32 : i32, i32
  }
  func.func @transform_1(%arg0: i32) -> (i32, i32) {
    %c0_i32 = arith.constant 0 : i32
    %c0_i32_0 = arith.constant 0 : i32
    %c0_i32_1 = arith.constant 0 : i32
    return %c0_i32, %c0_i32_0 : i32, i32
  }
  func.func @transform_2(%arg0: i32) -> (i32, i32) {
    %c0_i32 = arith.constant 0 : i32
    %c0_i32_0 = arith.constant 0 : i32
    return %arg0, %c0_i32 : i32, i32
  }
}

</mosaic_0001>

<llo_original>
// kernel: tpu_custom_call.1
$region0: #{tpu_custom_call.1}
  #allocation0 [shape = 'u32[]', space=smem, size = 0x4, offset = 0x4, fixed_abs, tag = 'smem constant byte address 0x4 - core index']
  #allocation1 [shape = 'u32[72,128]{1,0:T(1,128)}', space=vmem, size = 0x9000, scoped, tag = 'internal scratch']
  %s0 = inlined_call_operand.hbm [shape: f32[256,128], index: 0, kind: input, shape index: {}]
  %s1 = inlined_call_operand.hbm [shape: f32[128,384], index: 1, kind: input, shape index: {}]
  %s2 = inlined_call_operand.hbm [shape: f32[256,384], index: 2, kind: output, shape index: {}]
  %s3 = sld [smem:[#allocation0]]
  $region49: #{tpu_custom_call.1} parent=0
    _
  %s5 = ssub.s32 1, %s3
  %s6 = scalar_select 0, %s5, %s3
  $region1: #{tpu_custom_call.1} parent=0
    #allocation2 [shape = 'u8[131072]{0}', space=vmem, size = 0x20000, scoped, tag = 'input window, operand 0']
    #allocation3 [shape = 's32[2]{0}', space=sflag, size = 0x8, scoped, tag = 'scoped memory for tpu_custom_call.1']
    #allocation4 [shape = 's32[2]{0}', space=sflag, size = 0x8, scoped, tag = 'scoped memory for tpu_custom_call.1']
    #allocation5 [shape = 'u8[196608]{0}', space=vmem, size = 0x30000, scoped, tag = 'input window, operand 1, single buffered']
    #allocation6 [shape = 's32[1]{0}', space=sflag, size = 0x4, scoped, tag = 'scoped memory for tpu_custom_call.1']
    #allocation7 [shape = 'u8[393216]{0}', space=vmem, size = 0x60000, scoped, tag = 'output window, operand 0']
    %7 = vsyncpa [#allocation3], 0
    %s8 = scalar_lea.sflag [#allocation3], 1
    %9 = vsyncpa %s8, 0
    %10 = vsyncpa [#allocation6], 0
    %11 = vsyncpa [#allocation4], 0
    %s12 = scalar_lea.sflag [#allocation4], 1
    %13 = vsyncpa %s12, 0
    loop: start=0, step=1, limit=4
    $region2: #{tpu_custom_call.1} parent=1 // loop_pre_header
      _
    $region3: #{tpu_custom_call.1} parent=1 // loop_header
      %s15 = sphi 0, %s19
      %p16 = scmp.ge.s32.totalorder %s15, 4
      %s25 = sphi 0, %s27
      %s28 = sphi 0, %s25
      %s29 = sphi 0, %s28
      %s45 = sphi 0, %s29
      %s49 = sphi 0, %s49
      %s51 = sphi 0, %s49
      %s52 = sphi 0, %s51
      %s66 = sphi 0, %s52
      %s72 = sphi 0, %s74
      %s75 = sphi 0, %s72
      %s76 = sphi 0, %s75
      %s92 = sphi 0, %s76
    $region4: #{tpu_custom_call.1} parent=1 // loop_header_branch
      %18 = sbr.rel (%p16) target = $region8
    $region5: #{tpu_custom_call.1} parent=1 // loop_body
      %s20 = ssub.s32 %s15, 1
      %s21 = ssub.s32 %s15, 2
      %s22 = sadd.s32 %s15, 1
      %s23 = ssub.s32 %s15, %s22
      %p24 = scmp.eq.s32.totalorder %s23, 0
      %s26 = sadd.s32 %s25, 1
      %s27 = scalar_select %p24, %s25, %s26
      %p30 = pneg %p24
      %p31 = scmp.eq.s32.totalorder %s15, 1
      %p32 = por %p30, %p31
      %p33 = scmp.ne.s32.totalorder %s25, %s28
      %p34 = scmp.eq.s32.totalorder %s15, 0
      %p35 = por %p33, %p34
      %p36 = scmp.ne.s32.totalorder %s25, %s28
      %p37 = scmp.eq.s32.totalorder %s20, 1
      %p38 = por %p36, %p37
      %p39 = scmp.ne.s32.totalorder %s28, %s29
      %p40 = scmp.eq.s32.totalorder %s20, 0
      %p41 = por %p39, %p40
      %p42 = scmp.ne.s32.totalorder %s28, %s29
      %p43 = scmp.eq.s32.totalorder %s21, 1
      %p44 = por %p42, %p43
      %p46 = scmp.ne.s32.totalorder %s29, %s45
      %p47 = scmp.eq.s32.totalorder %s21, 0
      %p48 = por %p46, %p47
      %s50 = sadd.s32 %s49, 1
      %p53 = scmp.eq.s32.totalorder %s15, 1
      %p54 = scmp.ne.s32.totalorder %s49, %s51
      %p55 = scmp.eq.s32.totalorder %s15, 0
      %p56 = por %p54, %p55
      %p57 = scmp.ne.s32.totalorder %s49, %s51
      %p58 = scmp.eq.s32.totalorder %s20, 1
      %p59 = por %p57, %p58
      %p60 = scmp.ne.s32.totalorder %s51, %s52
      %p61 = scmp.eq.s32.totalorder %s20, 0
      %p62 = por %p60, %p61
      %p63 = scmp.ne.s32.totalorder %s51, %s52
      %p64 = scmp.eq.s32.totalorder %s21, 1
      %p65 = por %p63, %p64
      %p67 = scmp.ne.s32.totalorder %s52, %s66
      %p68 = scmp.eq.s32.totalorder %s21, 0
      %p69 = por %p67, %p68
      %s70 = ssub.s32 %s15, %s22
      %p71 = scmp.eq.s32.totalorder %s70, 0
      %s73 = sadd.s32 %s72, 1
      %s74 = scalar_select %p71, %s72, %s73
      %p77 = pneg %p71
      %p78 = scmp.eq.s32.totalorder %s15, 1
      %p79 = por %p77, %p78
      %p80 = scmp.ne.s32.totalorder %s72, %s75
      %p81 = scmp.eq.s32.totalorder %s15, 0
      %p82 = por %p80, %p81
      %p83 = scmp.ne.s32.totalorder %s72, %s75
      %p84 = scmp.eq.s32.totalorder %s20, 1
      %p85 = por %p83, %p84
      %p86 = scmp.ne.s32.totalorder %s75, %s76
      %p87 = scmp.eq.s32.totalorder %s20, 0
      %p88 = por %p86, %p87
      %p89 = scmp.ne.s32.totalorder %s75, %s76
      %p90 = scmp.eq.s32.totalorder %s21, 1
      %p91 = por %p89, %p90
      %p93 = scmp.ne.s32.totalorder %s76, %s92
      %p94 = scmp.eq.s32.totalorder %s21, 0
      %p95 = por %p93, %p94
      %p96 = scmp.le.s32.totalorder 1, %s15
      %p97 = scmp.lt.s32.totalorder %s15, 3
      %p98 = pnand %p96, %p97
      %p99 = pneg %p98
      // Predicated region
      $region9: #{tpu_custom_call.1} parent=5 // pred_check
        _
      $region10: #{tpu_custom_call.1} parent=5 // pred_check_branch
        %101 = sbr.rel (%p98) target = $region12
      $region11: #{tpu_custom_call.1} parent=5 // pred_region
        %s102 = ssub.s32 %s15, 1
        // Predicated region
        $region13: #{tpu_custom_call.1} parent=11 // pred_check
          %p103 = pneg %p62
        $region14: #{tpu_custom_call.1} parent=11 // pred_check_branch
          %105 = sbr.rel (%p103) target = $region16
        $region15: #{tpu_custom_call.1} parent=11 // pred_region
          %107 = vsyncadd [#allocation6], 0
          %s108 = sshll.u32 %s1, 4
          %s109 = int_to_ptr.hbm [resolvable:$true] %s108
          %s110 = sshll.u32 [#allocation5], 4
          %s111 = int_to_ptr.vmem [resolvable:$true] %s110
          %116 = dma.hbm_to_vmem [thread:$0]  %s109, 6144, %s111, [#allocation6], 384, 384, 24
        $region16: #{tpu_custom_call.1} parent=11 // pred_fallthru
          _
      $region12: #{tpu_custom_call.1} parent=5 // pred_fallthru
        _
      %p117 = scmp.lt.s32.totalorder %s15, 2
      // Predicated region
      $region17: #{tpu_custom_call.1} parent=5 // pred_check
        %p118 = pneg %p117
      $region18: #{tpu_custom_call.1} parent=5 // pred_check_branch
        %120 = sbr.rel (%p118) target = $region20
      $region19: #{tpu_custom_call.1} parent=5 // pred_region
        // Predicated region
        $region21: #{tpu_custom_call.1} parent=19 // pred_check
          %p121 = pneg %p35
        $region22: #{tpu_custom_call.1} parent=19 // pred_check_branch
          %123 = sbr.rel (%p121) target = $region24
        $region23: #{tpu_custom_call.1} parent=19 // pred_region
          %s124 = sand.u32 %s25, 1
          %s125 = scalar_lea.sflag [#allocation3], %s124
          %s126 = sand.u32 %s25, 1
          %s127 = smul.addr %s126, 128
          %s128 = scalar_lea.vmem [#allocation2], %s127
          %s129 = smul.u32 16, %s15
          %131 = vsyncadd %s125, 0
          %s132 = smul.addr %s129, 8
          %s133 = scalar_lea.hbm %s0, %s132
          %s134 = sshll.u32 %s133, 4
          %s135 = int_to_ptr.hbm [resolvable:$true] %s134
          %s136 = sshll.u32 %s128, 4
          %s137 = int_to_ptr.vmem [resolvable:$true] %s136
          %142 = dma.hbm_to_vmem [thread:$0]  %s135, 2048, %s137, %s125, 128, 128, 8
        $region24: #{tpu_custom_call.1} parent=19 // pred_fallthru
          _
      $region20: #{tpu_custom_call.1} parent=5 // pred_fallthru
        _
      %p143 = scmp.le.s32.totalorder 1, %s15
      %p144 = scmp.lt.s32.totalorder %s15, 3
      %p145 = pnand %p143, %p144
      %p146 = pneg %p145
      // Predicated region
      $region25: #{tpu_custom_call.1} parent=5 // pred_check
        _
      $region26: #{tpu_custom_call.1} parent=5 // pred_check_branch
        %148 = sbr.rel (%p145) target = $region28
      $region27: #{tpu_custom_call.1} parent=5 // pred_region
        %s149 = ssub.s32 %s15, 1
        %s150 = sand.u32 %s28, 1
        %s151 = scalar_lea.sflag [#allocation3], %s150
        %s152 = sand.u32 %s28, 1
        %s153 = smul.addr %s152, 128
        %s154 = scalar_lea.vmem [#allocation2], %s153
        // Predicated region
        $region29: #{tpu_custom_call.1} parent=27 // pred_check
          %p155 = pneg %p41
        $region30: #{tpu_custom_call.1} parent=27 // pred_check_branch
          %157 = sbr.rel (%p155) target = $region32
        $region31: #{tpu_custom_call.1} parent=27 // pred_region
          %159 = dma.done %s151, 2048
        $region32: #{tpu_custom_call.1} parent=27 // pred_fallthru
          _
        // Predicated region
        $region33: #{tpu_custom_call.1} parent=27 // pred_check
          %p160 = pneg %p62
        $region34: #{tpu_custom_call.1} parent=27 // pred_check_branch
          %162 = sbr.rel (%p160) target = $region36
        $region35: #{tpu_custom_call.1} parent=27 // pred_region
          %164 = dma.done [#allocation6], 6144
        $region36: #{tpu_custom_call.1} parent=27 // pred_fallthru
          _
        %s165 = sand.u32 %s28, 1
        %s166 = scalar_lea.sflag [#allocation3], %s165
        %s167 = sand.u32 %s28, 1
        %s168 = smul.addr %s167, 128
        %s169 = scalar_lea.vmem [#allocation2], %s168
        %p170 = pneg %p41
        %p171 = pneg %p38
        %p172 = pneg %p62
        %p173 = pneg %p59
        %p174 = pneg %p88
        %p175 = pneg %p85
        %s176 = sand.u32 %s75, 1
        %s177 = scalar_lea.sflag [#allocation4], %s176
        %s178 = sand.u32 %s75, 1
        %s179 = smul.addr %s178, 384
        %s180 = scalar_lea.vmem [#allocation7], %s179
        %s181 = smul.u32 16, %s20
        %s182 = smul.u32 16, %s20
        %v183 = vld [vmem:[%s154] sm:$0xff]
        %v184 = vld [vmem:[%s154 + $0x8] sm:$0xff]
        %v185 = vld [vmem:[%s154 + $0x10] sm:$0xff]
        %v186 = vld [vmem:[%s154 + $0x18] sm:$0xff]
        %v187 = vld [vmem:[%s154 + $0x20] sm:$0xff]
        %v188 = vld [vmem:[%s154 + $0x28] sm:$0xff]
        %v189 = vld [vmem:[%s154 + $0x30] sm:$0xff]
        %v190 = vld [vmem:[%s154 + $0x38] sm:$0xff]
        %v191 = vld [vmem:[%s154 + $0x40] sm:$0xff]
        %v192 = vld [vmem:[%s154 + $0x48] sm:$0xff]
        %v193 = vld [vmem:[%s154 + $0x50] sm:$0xff]
        %v194 = vld [vmem:[%s154 + $0x58] sm:$0xff]
        %v195 = vld [vmem:[%s154 + $0x60] sm:$0xff]
        %v196 = vld [vmem:[%s154 + $0x68] sm:$0xff]
        %v197 = vld [vmem:[%s154 + $0x70] sm:$0xff]
        %v198 = vld [vmem:[%s154 + $0x78] sm:$0xff]
        %v199 = vld [vmem:[#allocation5] sm:$0xff]
        %v200 = vld [vmem:[#allocation5 + $0x8] sm:$0xff]
        %v201 = vld [vmem:[#allocation5 + $0x10] sm:$0xff]
        %v202 = vld [vmem:[#allocation5 + $0x18] sm:$0xff]
        %v203 = vld [vmem:[#allocation5 + $0x20] sm:$0xff]
        %v204 = vld [vmem:[#allocation5 + $0x28] sm:$0xff]
        %v205 = vld [vmem:[#allocation5 + $0x30] sm:$0xff]
        %v206 = vld [vmem:[#allocation5 + $0x38] sm:$0xff]
        %v207 = vld [vmem:[#allocation5 + $0x40] sm:$0xff]
        %v208 = vld [vmem:[#allocation5 + $0x48] sm:$0xff]
        %v209 = vld [vmem:[#allocation5 + $0x50] sm:$0xff]
        %v210 = vld [vmem:[#allocation5 + $0x58] sm:$0xff]
        %v211 = vld [vmem:[#allocation5 + $0x60] sm:$0xff]
        %v212 = vld [vmem:[#allocation5 + $0x68] sm:$0xff]
        %v213 = vld [vmem:[#allocation5 + $0x70] sm:$0xff]
        %v214 = vld [vmem:[#allocation5 + $0x78] sm:$0xff]
        %v215 = vld [vmem:[#allocation5 + $0x80] sm:$0xff]
        %v216 = vld [vmem:[#allocation5 + $0x88] sm:$0xff]
        %v217 = vld [vmem:[#allocation5 + $0x90] sm:$0xff]
        %v218 = vld [vmem:[#allocation5 + $0x98] sm:$0xff]
        %v219 = vld [vmem:[#allocation5 + $0xa0] sm:$0xff]
        %v220 = vld [vmem:[#allocation5 + $0xa8] sm:$0xff]
        %v221 = vld [vmem:[#allocation5 + $0xb0] sm:$0xff]
        %v222 = vld [vmem:[#allocation5 + $0xb8] sm:$0xff]
        %v223 = vld [vmem:[#allocation5 + $0xc0] sm:$0xff]
        %v224 = vld [vmem:[#allocation5 + $0xc8] sm:$0xff]
        %v225 = vld [vmem:[#allocation5 + $0xd0] sm:$0xff]
        %v226 = vld [vmem:[#allocation5 + $0xd8] sm:$0xff]
        %v227 = vld [vmem:[#allocation5 + $0xe0] sm:$0xff]
        %v228 = vld [vmem:[#allocation5 + $0xe8] sm:$0xff]
        %v229 = vld [vmem:[#allocation5 + $0xf0] sm:$0xff]
        %v230 = vld [vmem:[#allocation5 + $0xf8] sm:$0xff]
        %v231 = vld [vmem:[#allocation5 + $0x100] sm:$0xff]
        %v232 = vld [vmem:[#allocation5 + $0x108] sm:$0xff]
        %v233 = vld [vmem:[#allocation5 + $0x110] sm:$0xff]
        %v234 = vld [vmem:[#allocation5 + $0x118] sm:$0xff]
        %v235 = vld [vmem:[#allocation5 + $0x120] sm:$0xff]
        %v236 = vld [vmem:[#allocation5 + $0x128] sm:$0xff]
        %v237 = vld [vmem:[#allocation5 + $0x130] sm:$0xff]
        %v238 = vld [vmem:[#allocation5 + $0x138] sm:$0xff]
        %v239 = vld [vmem:[#allocation5 + $0x140] sm:$0xff]
        %v240 = vld [vmem:[#allocation5 + $0x148] sm:$0xff]
        %v241 = vld [vmem:[#allocation5 + $0x150] sm:$0xff]
        %v242 = vld [vmem:[#allocation5 + $0x158] sm:$0xff]
        %v243 = vld [vmem:[#allocation5 + $0x160] sm:$0xff]
        %v244 = vld [vmem:[#allocation5 + $0x168] sm:$0xff]
        %v245 = vld [vmem:[#allocation5 + $0x170] sm:$0xff]
        %v246 = vld [vmem:[#allocation5 + $0x178] sm:$0xff]
        %247 = vmatpush.msra.mxu0 %v244
        %248 = vmatpush.msra.mxu0 %v241
        %249 = vmatpush.msra.mxu0 %v238
        %250 = vmatpush.msra.mxu0 %v235
        %251 = vmatpush.msra.mxu0 %v232
        %252 = vmatpush.msra.mxu0 %v229
        %253 = vmatpush.msra.mxu0 %v226
        %254 = vmatpush.msra.mxu0 %v223
        %255 = vmatpush.msra.mxu0 %v220
        %256 = vmatpush.msra.mxu0 %v217
        %257 = vmatpush.msra.mxu0 %v214
        %258 = vmatpush.msra.mxu0 %v211
        %259 = vmatpush.msra.mxu0 %v208
        %260 = vmatpush.msra.mxu0 %v205
        %261 = vmatpush.msra.mxu0 %v202
        %262 = vmatpush.msra.mxu0 %v199
        %263 = vmatmul.f32.gmra.mxu0 %v183
        %v264 = vpop.f32.mrf.mxu0
        %v265 = vadd.f32 0.0, %v264
        %266 = vmatmul.f32.gmra.mxu0 %v184
        %v267 = vpop.f32.mrf.mxu0
        %v268 = vadd.f32 0.0, %v267
        %269 = vmatmul.f32.gmra.mxu0 %v185
        %v270 = vpop.f32.mrf.mxu0
        %v271 = vadd.f32 0.0, %v270
        %272 = vmatmul.f32.gmra.mxu0 %v186
        %v273 = vpop.f32.mrf.mxu0
        %v274 = vadd.f32 0.0, %v273
        %275 = vmatmul.f32.gmra.mxu0 %v187
        %v276 = vpop.f32.mrf.mxu0
        %v277 = vadd.f32 0.0, %v276
        %278 = vmatmul.f32.gmra.mxu0 %v188
        %v279 = vpop.f32.mrf.mxu0
        %v280 = vadd.f32 0.0, %v279
        %281 = vmatmul.f32.gmra.mxu0 %v189
        %v282 = vpop.f32.mrf.mxu0
        %v283 = vadd.f32 0.0, %v282
        %284 = vmatmul.f32.gmra.mxu0 %v190
        %v285 = vpop.f32.mrf.mxu0
        %v286 = vadd.f32 0.0, %v285
        %287 = vmatmul.f32.gmra.mxu0 %v191
        %v288 = vpop.f32.mrf.mxu0
        %v289 = vadd.f32 0.0, %v288
        %290 = vmatmul.f32.gmra.mxu0 %v192
        %v291 = vpop.f32.mrf.mxu0
        %v292 = vadd.f32 0.0, %v291
        %293 = vmatmul.f32.gmra.mxu0 %v193
        %v294 = vpop.f32.mrf.mxu0
        %v295 = vadd.f32 0.0, %v294
        %296 = vmatmul.f32.gmra.mxu0 %v194
        %v297 = vpop.f32.mrf.mxu0
        %v298 = vadd.f32 0.0, %v297
        %299 = vmatmul.f32.gmra.mxu0 %v195
        %v300 = vpop.f32.mrf.mxu0
        %v301 = vadd.f32 0.0, %v300
        %302 = vmatmul.f32.gmra.mxu0 %v196
        %v303 = vpop.f32.mrf.mxu0
        %v304 = vadd.f32 0.0, %v303
        %305 = vmatmul.f32.gmra.mxu0 %v197
        %v306 = vpop.f32.mrf.mxu0
        %v307 = vadd.f32 0.0, %v306
        %308 = vmatmul.f32.gmra.mxu0 %v198
        %v309 = vpop.f32.mrf.mxu0
        %v310 = vadd.f32 0.0, %v309
        %311 = vdwg.mxu0
        %312 = vmatpush.msra.mxu0 %v245
        %313 = vmatpush.msra.mxu0 %v242
        %314 = vmatpush.msra.mxu0 %v239
        %315 = vmatpush.msra.mxu0 %v236
        %316 = vmatpush.msra.mxu0 %v233
        %317 = vmatpush.msra.mxu0 %v230
        %318 = vmatpush.msra.mxu0 %v227
        %319 = vmatpush.msra.mxu0 %v224
        %320 = vmatpush.msra.mxu0 %v221
        %321 = vmatpush.msra.mxu0 %v218
        %322 = vmatpush.msra.mxu0 %v215
        %323 = vmatpush.msra.mxu0 %v212
        %324 = vmatpush.msra.mxu0 %v209
        %325 = vmatpush.msra.mxu0 %v206
        %326 = vmatpush.msra.mxu0 %v203
        %327 = vmatpush.msra.mxu0 %v200
        %328 = vmatmul.f32.gmra.mxu0 %v183
        %v329 = vpop.f32.mrf.mxu0
        %v330 = vadd.f32 0.0, %v329
        %331 = vmatmul.f32.gmra.mxu0 %v184
        %v332 = vpop.f32.mrf.mxu0
        %v333 = vadd.f32 0.0, %v332
        %334 = vmatmul.f32.gmra.mxu0 %v185
        %v335 = vpop.f32.mrf.mxu0
        %v336 = vadd.f32 0.0, %v335
        %337 = vmatmul.f32.gmra.mxu0 %v186
        %v338 = vpop.f32.mrf.mxu0
        %v339 = vadd.f32 0.0, %v338
        %340 = vmatmul.f32.gmra.mxu0 %v187
        %v341 = vpop.f32.mrf.mxu0
        %v342 = vadd.f32 0.0, %v341
        %343 = vmatmul.f32.gmra.mxu0 %v188
        %v344 = vpop.f32.mrf.mxu0
        %v345 = vadd.f32 0.0, %v344
        %346 = vmatmul.f32.gmra.mxu0 %v189
        %v347 = vpop.f32.mrf.mxu0
        %v348 = vadd.f32 0.0, %v347
        %349 = vmatmul.f32.gmra.mxu0 %v190
        %v350 = vpop.f32.mrf.mxu0
        %v351 = vadd.f32 0.0, %v350
        %352 = vmatmul.f32.gmra.mxu0 %v191
        %v353 = vpop.f32.mrf.mxu0
        %v354 = vadd.f32 0.0, %v353
        %355 = vmatmul.f32.gmra.mxu0 %v192
        %v356 = vpop.f32.mrf.mxu0
        %v357 = vadd.f32 0.0, %v356
        %358 = vmatmul.f32.gmra.mxu0 %v193
        %v359 = vpop.f32.mrf.mxu0
        %v360 = vadd.f32 0.0, %v359
        %361 = vmatmul.f32.gmra.mxu0 %v194
        %v362 = vpop.f32.mrf.mxu0
        %v363 = vadd.f32 0.0, %v362
        %364 = vmatmul.f32.gmra.mxu0 %v195
        %v365 = vpop.f32.mrf.mxu0
        %v366 = vadd.f32 0.0, %v365
        %367 = vmatmul.f32.gmra.mxu0 %v196
        %v368 = vpop.f32.mrf.mxu0
        %v369 = vadd.f32 0.0, %v368
        %370 = vmatmul.f32.gmra.mxu0 %v197
        %v371 = vpop.f32.mrf.mxu0
        %v372 = vadd.f32 0.0, %v371
        %373 = vmatmul.f32.gmra.mxu0 %v198
        %v374 = vpop.f32.mrf.mxu0
        %v375 = vadd.f32 0.0, %v374
        %376 = vdwg.mxu0
        %377 = vmatpush.msra.mxu0 %v246
        %378 = vmatpush.msra.mxu0 %v243
        %379 = vmatpush.msra.mxu0 %v240
        %380 = vmatpush.msra.mxu0 %v237
        %381 = vmatpush.msra.mxu0 %v234
        %382 = vmatpush.msra.mxu0 %v231
        %383 = vmatpush.msra.mxu0 %v228
        %384 = vmatpush.msra.mxu0 %v225
        %385 = vmatpush.msra.mxu0 %v222
        %386 = vmatpush.msra.mxu0 %v219
        %387 = vmatpush.msra.mxu0 %v216
        %388 = vmatpush.msra.mxu0 %v213
        %389 = vmatpush.msra.mxu0 %v210
        %390 = vmatpush.msra.mxu0 %v207
        %391 = vmatpush.msra.mxu0 %v204
        %392 = vmatpush.msra.mxu0 %v201
        %393 = vmatmul.f32.gmra.mxu0 %v183
        %v394 = vpop.f32.mrf.mxu0
        %v395 = vadd.f32 0.0, %v394
        %396 = vmatmul.f32.gmra.mxu0 %v184
        %v397 = vpop.f32.mrf.mxu0
        %v398 = vadd.f32 0.0, %v397
        %399 = vmatmul.f32.gmra.mxu0 %v185
        %v400 = vpop.f32.mrf.mxu0
        %v401 = vadd.f32 0.0, %v400
        %402 = vmatmul.f32.gmra.mxu0 %v186
        %v403 = vpop.f32.mrf.mxu0
        %v404 = vadd.f32 0.0, %v403
        %405 = vmatmul.f32.gmra.mxu0 %v187
        %v406 = vpop.f32.mrf.mxu0
        %v407 = vadd.f32 0.0, %v406
        %408 = vmatmul.f32.gmra.mxu0 %v188
        %v409 = vpop.f32.mrf.mxu0
        %v410 = vadd.f32 0.0, %v409
        %411 = vmatmul.f32.gmra.mxu0 %v189
        %v412 = vpop.f32.mrf.mxu0
        %v413 = vadd.f32 0.0, %v412
        %414 = vmatmul.f32.gmra.mxu0 %v190
        %v415 = vpop.f32.mrf.mxu0
        %v416 = vadd.f32 0.0, %v415
        %417 = vmatmul.f32.gmra.mxu0 %v191
        %v418 = vpop.f32.mrf.mxu0
        %v419 = vadd.f32 0.0, %v418
        %420 = vmatmul.f32.gmra.mxu0 %v192
        %v421 = vpop.f32.mrf.mxu0
        %v422 = vadd.f32 0.0, %v421
        %423 = vmatmul.f32.gmra.mxu0 %v193
        %v424 = vpop.f32.mrf.mxu0
        %v425 = vadd.f32 0.0, %v424
        %426 = vmatmul.f32.gmra.mxu0 %v194
        %v427 = vpop.f32.mrf.mxu0
        %v428 = vadd.f32 0.0, %v427
        %429 = vmatmul.f32.gmra.mxu0 %v195
        %v430 = vpop.f32.mrf.mxu0
        %v431 = vadd.f32 0.0, %v430
        %432 = vmatmul.f32.gmra.mxu0 %v196
        %v433 = vpop.f32.mrf.mxu0
        %v434 = vadd.f32 0.0, %v433
        %435 = vmatmul.f32.gmra.mxu0 %v197
        %v436 = vpop.f32.mrf.mxu0
        %v437 = vadd.f32 0.0, %v436
        %438 = vmatmul.f32.gmra.mxu0 %v198
        %v439 = vpop.f32.mrf.mxu0
        %v440 = vadd.f32 0.0, %v439
        %441 = vdwg.mxu0
        %442 = vst [vmem:[%s180] sm:$0xff] %v265
        %443 = vst [vmem:[%s180 + $0x8] sm:$0xff] %v330
        %444 = vst [vmem:[%s180 + $0x10] sm:$0xff] %v395
        %445 = vst [vmem:[%s180 + $0x18] sm:$0xff] %v268
        %446 = vst [vmem:[%s180 + $0x20] sm:$0xff] %v333
        %447 = vst [vmem:[%s180 + $0x28] sm:$0xff] %v398
        %448 = vst [vmem:[%s180 + $0x30] sm:$0xff] %v271
        %449 = vst [vmem:[%s180 + $0x38] sm:$0xff] %v336
        %450 = vst [vmem:[%s180 + $0x40] sm:$0xff] %v401
        %451 = vst [vmem:[%s180 + $0x48] sm:$0xff] %v274
        %452 = vst [vmem:[%s180 + $0x50] sm:$0xff] %v339
        %453 = vst [vmem:[%s180 + $0x58] sm:$0xff] %v404
        %454 = vst [vmem:[%s180 + $0x60] sm:$0xff] %v277
        %455 = vst [vmem:[%s180 + $0x68] sm:$0xff] %v342
        %456 = vst [vmem:[%s180 + $0x70] sm:$0xff] %v407
        %457 = vst [vmem:[%s180 + $0x78] sm:$0xff] %v280
        %458 = vst [vmem:[%s180 + $0x80] sm:$0xff] %v345
        %459 = vst [vmem:[%s180 + $0x88] sm:$0xff] %v410
        %460 = vst [vmem:[%s180 + $0x90] sm:$0xff] %v283
        %461 = vst [vmem:[%s180 + $0x98] sm:$0xff] %v348
        %462 = vst [vmem:[%s180 + $0xa0] sm:$0xff] %v413
        %463 = vst [vmem:[%s180 + $0xa8] sm:$0xff] %v286
        %464 = vst [vmem:[%s180 + $0xb0] sm:$0xff] %v351
        %465 = vst [vmem:[%s180 + $0xb8] sm:$0xff] %v416
        %466 = vst [vmem:[%s180 + $0xc0] sm:$0xff] %v289
        %467 = vst [vmem:[%s180 + $0xc8] sm:$0xff] %v354
        %468 = vst [vmem:[%s180 + $0xd0] sm:$0xff] %v419
        %469 = vst [vmem:[%s180 + $0xd8] sm:$0xff] %v292
        %470 = vst [vmem:[%s180 + $0xe0] sm:$0xff] %v357
        %471 = vst [vmem:[%s180 + $0xe8] sm:$0xff] %v422
        %472 = vst [vmem:[%s180 + $0xf0] sm:$0xff] %v295
        %473 = vst [vmem:[%s180 + $0xf8] sm:$0xff] %v360
        %474 = vst [vmem:[%s180 + $0x100] sm:$0xff] %v425
        %475 = vst [vmem:[%s180 + $0x108] sm:$0xff] %v298
        %476 = vst [vmem:[%s180 + $0x110] sm:$0xff] %v363
        %477 = vst [vmem:[%s180 + $0x118] sm:$0xff] %v428
        %478 = vst [vmem:[%s180 + $0x120] sm:$0xff] %v301
        %479 = vst [vmem:[%s180 + $0x128] sm:$0xff] %v366
        %480 = vst [vmem:[%s180 + $0x130] sm:$0xff] %v431
        %481 = vst [vmem:[%s180 + $0x138] sm:$0xff] %v304
        %482 = vst [vmem:[%s180 + $0x140] sm:$0xff] %v369
        %483 = vst [vmem:[%s180 + $0x148] sm:$0xff] %v434
        %484 = vst [vmem:[%s180 + $0x150] sm:$0xff] %v307
        %485 = vst [vmem:[%s180 + $0x158] sm:$0xff] %v372
        %486 = vst [vmem:[%s180 + $0x160] sm:$0xff] %v437
        %487 = vst [vmem:[%s180 + $0x168] sm:$0xff] %v310
        %488 = vst [vmem:[%s180 + $0x170] sm:$0xff] %v375
        %489 = vst [vmem:[%s180 + $0x178] sm:$0xff] %v440
        %s490 = sand.u32 %s75, 1
        %s491 = scalar_lea.sflag [#allocation4], %s490
        %s492 = sand.u32 %s75, 1
        %s493 = smul.addr %s492, 384
        %s494 = scalar_lea.vmem [#allocation7], %s493
        // Predicated region
        $region37: #{tpu_custom_call.1} parent=27 // pred_check
          %p495 = pneg %p85
        $region38: #{tpu_custom_call.1} parent=27 // pred_check_branch
          %497 = sbr.rel (%p495) target = $region40
        $region39: #{tpu_custom_call.1} parent=27 // pred_region
          %s498 = smul.u32 16, %s20
          %500 = vsyncadd %s491, 0
          %s501 = smul.addr %s498, 3
          %s502 = smul.addr %s501, 8
          %s503 = scalar_lea.hbm %s2, %s502
          %s504 = sshll.u32 %s494, 4
          %s505 = int_to_ptr.vmem [resolvable:$true] %s504
          %s506 = sshll.u32 %s503, 4
          %s507 = int_to_ptr.hbm [resolvable:$true] %s506
          %512 = dma.vmem_to_hbm [thread:$0]  %s505, 6144, %s507, %s491, 384, 384, 24
        $region40: #{tpu_custom_call.1} parent=27 // pred_fallthru
          _
      $region28: #{tpu_custom_call.1} parent=5 // pred_fallthru
        _
      %p513 = scmp.le.s32.totalorder 2, %s15
      // Predicated region
      $region41: #{tpu_custom_call.1} parent=5 // pred_check
        %p514 = pneg %p513
      $region42: #{tpu_custom_call.1} parent=5 // pred_check_branch
        %516 = sbr.rel (%p514) target = $region44
      $region43: #{tpu_custom_call.1} parent=5 // pred_region
        %s517 = ssub.s32 %s15, 2
        // Predicated region
        $region45: #{tpu_custom_call.1} parent=43 // pred_check
          %p518 = pneg %p91
        $region46: #{tpu_custom_call.1} parent=43 // pred_check_branch
          %520 = sbr.rel (%p518) target = $region48
        $region47: #{tpu_custom_call.1} parent=43 // pred_region
          %s521 = sand.u32 %s76, 1
          %s522 = scalar_lea.sflag [#allocation4], %s521
          %s523 = sand.u32 %s76, 1
          %s524 = smul.addr %s523, 384
          %s525 = scalar_lea.vmem [#allocation7], %s524
          %527 = dma.done %s522, 6144
        $region48: #{tpu_custom_call.1} parent=43 // pred_fallthru
          _
      $region44: #{tpu_custom_call.1} parent=5 // pred_fallthru
        _
    $region6: #{tpu_custom_call.1} parent=1 // loop_footer
      %s19 = sadd.s32 1, %s15
    $region7: #{tpu_custom_call.1} parent=1 // loop_footer_branch
      %14 = sbr.rel target = $region3
    $region8: #{tpu_custom_call.1} parent=1 // loop_exit
      _
    %528 = vsyncpa [#allocation3], 1
    %s529 = scalar_lea.sflag [#allocation3], 1
    %530 = vsyncpa %s529, 1
    %531 = vsyncpa [#allocation6], 1
    %532 = vsyncpa [#allocation4], 1
    %s533 = scalar_lea.sflag [#allocation4], 1
    %534 = vsyncpa %s533, 1

</llo_original>
